<compile_context>
chip_gen: v7x
topology: tpu7x:2x2x1
jax: 0.10.0
libtpu: 0.0.40
codegen_flags: <defaults>
</compile_context>

<pallas_src>
import jax
import jax.numpy as jnp
from jax.experimental import pallas as pl
from jax.experimental.pallas import tpu as pltpu


def mlp_kernel(x_ref, w1t_ref, b1_ref, w2_ref, b2_ref, o_ref):
    # x_ref:  (n_in, TB)      batch on the 128-lane axis
    # w1t_ref:(hidden, n_in)  b1_ref:(hidden, 1)
    # w2_ref: (hidden, 1)     b2_ref:(1, 1)
    # o_ref:  (1, TB)         lane-dense output slab
    x = x_ref[...]
    w1t = w1t_ref[...]
    n_in = x.shape[0]

    # fc1 on the VPU: K = n_in (=3) unrolled as broadcast FMAs. A K=3 MXU pass
    # would use <2% of the systolic array and add result-FIFO latency.
    h = b1_ref[...] + w1t[:, 0:1] * x[0:1, :]             # (hidden, TB)
    for k in range(1, n_in):                              # static unroll (3)
        h = h + w1t[:, k:k + 1] * x[k:k + 1, :]
    h = jnp.maximum(h, 0.0)                               # ReLU, full lane width

    # fc2 (N=1): broadcast-multiply + sublane reduction (XLU slot) keeps the
    # output lane-dense and avoids a 1-column MXU matmul.
    y = jnp.sum(w2_ref[...] * h, axis=0, keepdims=True)   # (1, TB)
    o_ref[...] = (y + b2_ref[...]).astype(o_ref.dtype)


def simple_nn_forward(x, w1, b1, w2, b2, *, tb=1024):
    """relu(x @ w1 + b1) @ w2 + b2 ; x: (B, 3) f32 -> (B, 1) f32."""
    B, n_in = x.shape
    hidden = w1.shape[1]
    n_out = w2.shape[1]

    # Batch tile must be a multiple of 128 (lane axis); never larger than the
    # padded batch, never smaller than one lane tile.
    tb = max(128, (min(tb, pl.cdiv(B, 128) * 128) // 128) * 128)
    bp = pl.cdiv(B, tb) * tb
    grid = (bp // tb,)

    # Layout plumbing outside the kernel: feature-major (lane-dense) views.
    x_t = jnp.pad(x, ((0, bp - B), (0, 0))).T             # (n_in, bp)
    w1_t = w1.T                                           # (hidden, n_in)
    b1_c = b1.reshape(hidden, 1)                          # (hidden, 1)
    w2_c = w2.reshape(hidden, n_out)                      # (hidden, 1)
    b2_c = b2.reshape(n_out, 1)                           # (1, 1)

    y_t = pl.pallas_call(
        mlp_kernel,
        out_shape=jax.ShapeDtypeStruct((n_out, bp), jnp.float32),
        grid=grid,
        in_specs=[
            pl.BlockSpec((n_in, tb), lambda i: (0, i)),       # streamed per tile
            pl.BlockSpec((hidden, n_in), lambda i: (0, 0)),   # VMEM-resident
            pl.BlockSpec((hidden, 1), lambda i: (0, 0)),
            pl.BlockSpec((hidden, n_out), lambda i: (0, 0)),
            pl.BlockSpec((n_out, 1), lambda i: (0, 0)),
        ],
        out_specs=pl.BlockSpec((n_out, tb), lambda i: (0, i)),
        compiler_params=pltpu.CompilerParams(
            dimension_semantics=("parallel",)),               # v7x megacore split
    )(x_t, w1_t, b1_c, w2_c, b2_c)

    return y_t.T[:B]                                          # (B, 1)


def init_params(key):
    """Deterministic init matching PyTorch Linear default (uniform ±1/sqrt(fan_in)).
    Weights stored as (in_features, out_features) so forward is x @ W + b."""
    k1, k2, k3, k4 = jax.random.split(key, 4)
    lim1 = 1.0 / jnp.sqrt(3.0)
    lim2 = 1.0 / jnp.sqrt(50.0)
    w1 = jax.random.uniform(k1, (3, 50), jnp.float32, -lim1, lim1)
    b1 = jax.random.uniform(k2, (50,), jnp.float32, -lim1, lim1)
    w2 = jax.random.uniform(k3, (50, 1), jnp.float32, -lim2, lim2)
    b2 = jax.random.uniform(k4, (1,), jnp.float32, -lim2, lim2)
    return w1, b1, w2, b2


if __name__ == "__main__":
    key = jax.random.PRNGKey(0)
    k_x, k_x2, k_p = jax.random.split(key, 3)

    w1, b1, w2, b2 = init_params(k_p)
    fwd = jax.jit(simple_nn_forward, static_argnames=("tb",))

    # Small batch (pads up to one 128-wide lane tile, grid = (1,)).
    x_small = jax.random.normal(k_x, (8, 3), jnp.float32)
    out_small = jax.block_until_ready(fwd(x_small, w1, b1, w2, b2))

    # Batch spanning several grid steps (exercises tiling + index_maps).
    x_big = jax.random.normal(k_x2, (300, 3), jnp.float32)
    out_big = jax.block_until_ready(fwd(x_big, w1, b1, w2, b2, tb=128))

    def reference(x):
        h = jnp.maximum(
            jnp.einsum("bi,ih->bh", x, w1, precision="highest") + b1, 0.0)
        return jnp.einsum("bh,ho->bo", h, w2, precision="highest") + b2

    assert out_small.shape == (8, 1)
    assert out_big.shape == (300, 1)
    assert jnp.allclose(out_small, reference(x_small), atol=1e-4, rtol=1e-4)
    assert jnp.allclose(out_big, reference(x_big), atol=1e-4, rtol=1e-4)

    print("KERNEL_OK")
</pallas_src>

<mosaic_0001>
module attributes {stable_mosaic.version = 11 : i64} {
  func.func @mlp_kernel(%arg0: i32, %arg1: memref<3x128xf32, #tpu.memory_space<vmem>>, %arg2: memref<50x3xf32, #tpu.memory_space<vmem>>, %arg3: memref<50x1xf32, #tpu.memory_space<vmem>>, %arg4: memref<50x1xf32, #tpu.memory_space<vmem>>, %arg5: memref<1x1xf32, #tpu.memory_space<vmem>>, %arg6: memref<1x128xf32, #tpu.memory_space<vmem>>) attributes {dimension_semantics = [#tpu.dimension_semantics<parallel>], iteration_bounds = array<i64: 1>, scalar_prefetch = 0 : i64, scratch_operands = 0 : i64, tpu.core_type = #tpu.core_type<tc>, window_params = [{transform_indices = @transform_0, window_bounds = array<i64: 3, 128>}, {pipeline_mode = #tpu.pipeline_mode<synchronous>, transform_indices = @transform_1, window_bounds = array<i64: 50, 3>}, {pipeline_mode = #tpu.pipeline_mode<synchronous>, transform_indices = @transform_2, window_bounds = array<i64: 50, 1>}, {pipeline_mode = #tpu.pipeline_mode<synchronous>, transform_indices = @transform_3, window_bounds = array<i64: 50, 1>}, {pipeline_mode = #tpu.pipeline_mode<synchronous>, transform_indices = @transform_4, window_bounds = array<i64: 1, 1>}, {transform_indices = @transform_5, window_bounds = array<i64: 1, 128>}]} {
    %c0 = arith.constant 0 : index
    %c0_0 = arith.constant 0 : index
    %0 = vector.load %arg1[%c0, %c0_0] : memref<3x128xf32, #tpu.memory_space<vmem>>, vector<3x128xf32>
    %c0_1 = arith.constant 0 : index
    %c0_2 = arith.constant 0 : index
    %1 = vector.load %arg2[%c0_1, %c0_2] : memref<50x3xf32, #tpu.memory_space<vmem>>, vector<50x3xf32>
    %c0_3 = arith.constant 0 : index
    %c0_4 = arith.constant 0 : index
    %2 = vector.load %arg3[%c0_3, %c0_4] : memref<50x1xf32, #tpu.memory_space<vmem>>, vector<50x1xf32>
    %3 = vector.extract_strided_slice %1 {offsets = [0, 0], sizes = [50, 1], strides = [1, 1]} : vector<50x3xf32> to vector<50x1xf32>
    %4 = vector.extract_strided_slice %0 {offsets = [0, 0], sizes = [1, 128], strides = [1, 1]} : vector<3x128xf32> to vector<1x128xf32>
    %5 = vector.broadcast %3 : vector<50x1xf32> to vector<50x128xf32>
    %6 = vector.broadcast %4 : vector<1x128xf32> to vector<50x128xf32>
    %7 = arith.mulf %5, %6 : vector<50x128xf32>
    %8 = vector.broadcast %2 : vector<50x1xf32> to vector<50x128xf32>
    %9 = arith.addf %8, %7 : vector<50x128xf32>
    %10 = vector.extract_strided_slice %1 {offsets = [0, 1], sizes = [50, 1], strides = [1, 1]} : vector<50x3xf32> to vector<50x1xf32>
    %11 = vector.extract_strided_slice %0 {offsets = [1, 0], sizes = [1, 128], strides = [1, 1]} : vector<3x128xf32> to vector<1x128xf32>
    %12 = vector.broadcast %10 : vector<50x1xf32> to vector<50x128xf32>
    %13 = vector.broadcast %11 : vector<1x128xf32> to vector<50x128xf32>
    %14 = arith.mulf %12, %13 : vector<50x128xf32>
    %15 = arith.addf %9, %14 : vector<50x128xf32>
    %16 = vector.extract_strided_slice %1 {offsets = [0, 2], sizes = [50, 1], strides = [1, 1]} : vector<50x3xf32> to vector<50x1xf32>
    %17 = vector.extract_strided_slice %0 {offsets = [2, 0], sizes = [1, 128], strides = [1, 1]} : vector<3x128xf32> to vector<1x128xf32>
    %18 = vector.broadcast %16 : vector<50x1xf32> to vector<50x128xf32>
    %19 = vector.broadcast %17 : vector<1x128xf32> to vector<50x128xf32>
    %20 = arith.mulf %18, %19 : vector<50x128xf32>
    %21 = arith.addf %15, %20 : vector<50x128xf32>
    %cst = arith.constant 0.000000e+00 : f32
    %22 = vector.broadcast %cst : f32 to vector<50x128xf32>
    %23 = arith.maximumf %21, %22 : vector<50x128xf32>
    %c0_5 = arith.constant 0 : index
    %c0_6 = arith.constant 0 : index
    %24 = vector.load %arg4[%c0_5, %c0_6] : memref<50x1xf32, #tpu.memory_space<vmem>>, vector<50x1xf32>
    %25 = vector.broadcast %24 : vector<50x1xf32> to vector<50x128xf32>
    %26 = arith.mulf %25, %23 : vector<50x128xf32>
    %cst_7 = arith.constant dense<0.000000e+00> : vector<128xf32>
    %27 = vector.multi_reduction <add>, %26, %cst_7 [0] : vector<50x128xf32> to vector<128xf32>
    %28 = vector.shape_cast %27 : vector<128xf32> to vector<1x128xf32>
    %c0_8 = arith.constant 0 : index
    %c0_9 = arith.constant 0 : index
    %29 = vector.load %arg5[%c0_8, %c0_9] : memref<1x1xf32, #tpu.memory_space<vmem>>, vector<1x1xf32>
    %30 = vector.broadcast %29 : vector<1x1xf32> to vector<1x128xf32>
    %31 = arith.addf %28, %30 : vector<1x128xf32>
    %c0_10 = arith.constant 0 : index
    %c0_11 = arith.constant 0 : index
    %32 = vector.load %arg6[%c0_10, %c0_11] : memref<1x128xf32, #tpu.memory_space<vmem>>, vector<1x128xf32>
    tpu.vector_store %arg6[%c0_10, %c0_11], %31 {strides = array<i32>} : memref<1x128xf32, #tpu.memory_space<vmem>>, vector<1x128xf32>,
    return
  }
  func.func @transform_0(%arg0: i32) -> (i32, i32) {
    %c0_i32 = arith.constant 0 : i32
    %c0_i32_0 = arith.constant 0 : i32
    return %c0_i32, %arg0 : i32, i32
  }
  func.func @transform_1(%arg0: i32) -> (i32, i32) {
    %c0_i32 = arith.constant 0 : i32
    %c0_i32_0 = arith.constant 0 : i32
    %c0_i32_1 = arith.constant 0 : i32
    return %c0_i32, %c0_i32_0 : i32, i32
  }
  func.func @transform_2(%arg0: i32) -> (i32, i32) {
    %c0_i32 = arith.constant 0 : i32
    %c0_i32_0 = arith.constant 0 : i32
    %c0_i32_1 = arith.constant 0 : i32
    return %c0_i32, %c0_i32_0 : i32, i32
  }
  func.func @transform_3(%arg0: i32) -> (i32, i32) {
    %c0_i32 = arith.constant 0 : i32
    %c0_i32_0 = arith.constant 0 : i32
    %c0_i32_1 = arith.constant 0 : i32
    return %c0_i32, %c0_i32_0 : i32, i32
  }
  func.func @transform_4(%arg0: i32) -> (i32, i32) {
    %c0_i32 = arith.constant 0 : i32
    %c0_i32_0 = arith.constant 0 : i32
    %c0_i32_1 = arith.constant 0 : i32
    return %c0_i32, %c0_i32_0 : i32, i32
  }
  func.func @transform_5(%arg0: i32) -> (i32, i32) {
    %c0_i32 = arith.constant 0 : i32
    %c0_i32_0 = arith.constant 0 : i32
    return %c0_i32, %arg0 : i32, i32
  }
}

</mosaic_0001>

<llo_original>
// kernel: simple_nn_forward.1
$region0: #{simple_nn_forward.1}
  #allocation0 [shape = 'u32[]', space=smem, size = 0x4, offset = 0x4, fixed_abs, tag = 'smem constant byte address 0x4 - core index']
  #allocation1 [shape = 'u32[144,128]{1,0:T(1,128)}', space=vmem, size = 0x12000, scoped, tag = 'internal scratch']
  #allocation2 [shape = 'f32[1,1]{1,0:T(1,128)S(1)}', space=vmem, size = 0x200, scoped, tag = 'scoped memory for simple_nn_forward.1']
  %s0 = inlined_call_operand.vmem [shape: f32[3,128], index: 0, kind: input, shape index: {}]
  %s1 = inlined_call_operand.vmem [shape: f32[50,3], index: 1, kind: input, shape index: {}]
  %s2 = inlined_call_operand.vmem [shape: f32[50,1], index: 2, kind: input, shape index: {}]
  %s3 = inlined_call_operand.vmem [shape: f32[50,1], index: 3, kind: input, shape index: {}]
  %s4 = inlined_call_operand.<no memory space> [shape: f32[1,1], index: 4, kind: input, shape index: {}]
  %s5 = inlined_call_operand.vmem [shape: f32[1,128], index: 5, kind: output, shape index: {}]
  %s6 = sld [smem:[#allocation0]]
  $region30: #{simple_nn_forward.1} parent=0
    _
  %s8 = ssub.s32 1, %s6
  %s9 = scalar_select 0, %s8, %s6
  %v10 = vstv %s4
  %11 = vst [vmem:[#allocation2] sm:$0x1] %v10
  // Predicated region
  $region2: #{simple_nn_forward.1} parent=0 // pred_check
    _
  $region3: #{simple_nn_forward.1} parent=0 // pred_check_branch
    %13 = sbr.rel (0) target = $region5
  $region4: #{simple_nn_forward.1} parent=0 // pred_region
    _
  $region5: #{simple_nn_forward.1} parent=0 // pred_fallthru
    _
  // Predicated region
  $region6: #{simple_nn_forward.1} parent=0 // pred_check
    _
  $region7: #{simple_nn_forward.1} parent=0 // pred_check_branch
    %15 = sbr.rel (0) target = $region9
  $region8: #{simple_nn_forward.1} parent=0 // pred_region
    _
  $region9: #{simple_nn_forward.1} parent=0 // pred_fallthru
    _
  // Predicated region
  $region10: #{simple_nn_forward.1} parent=0 // pred_check
    _
  $region11: #{simple_nn_forward.1} parent=0 // pred_check_branch
    %17 = sbr.rel (0) target = $region13
  $region12: #{simple_nn_forward.1} parent=0 // pred_region
    _
  $region13: #{simple_nn_forward.1} parent=0 // pred_fallthru
    _
  // Predicated region
  $region14: #{simple_nn_forward.1} parent=0 // pred_check
    _
  $region15: #{simple_nn_forward.1} parent=0 // pred_check_branch
    %19 = sbr.rel (0) target = $region17
  $region16: #{simple_nn_forward.1} parent=0 // pred_region
    _
  $region17: #{simple_nn_forward.1} parent=0 // pred_fallthru
    _
  // Predicated region
  $region18: #{simple_nn_forward.1} parent=0 // pred_check
    _
  $region19: #{simple_nn_forward.1} parent=0 // pred_check_branch
    %21 = sbr.rel (0) target = $region21
  $region20: #{simple_nn_forward.1} parent=0 // pred_region
    _
  $region21: #{simple_nn_forward.1} parent=0 // pred_fallthru
    _
  %v22 = vld [vmem:[%s0] sm:$0x7]
  %v23 = vld [vmem:[%s1] sm:$0xff]
  %v24 = vld [vmem:[%s1 + $0x8] sm:$0xff]
  %v25 = vld [vmem:[%s1 + $0x10] sm:$0xff]
  %v26 = vld [vmem:[%s1 + $0x18] sm:$0xff]
  %v27 = vld [vmem:[%s1 + $0x20] sm:$0xff]
  %v28 = vld [vmem:[%s1 + $0x28] sm:$0xff]
  %v29 = vld [vmem:[%s1 + $0x30] sm:$0x3]
  %v30 = vld [vmem:[%s2] sm:$0xff]
  %v31 = vld [vmem:[%s2 + $0x8] sm:$0xff]
  %v32 = vld [vmem:[%s2 + $0x10] sm:$0xff]
  %v33 = vld [vmem:[%s2 + $0x18] sm:$0xff]
  %v34 = vld [vmem:[%s2 + $0x20] sm:$0xff]
  %v35 = vld [vmem:[%s2 + $0x28] sm:$0xff]
  %v36 = vld [vmem:[%s2 + $0x30] sm:$0x3]
  %38 = vset.pattern.permute.xlu0 0
  %39 = vperm.xlu0 %38, %v23
  %v40 = vpop.permute.xlu0 %39
  %43 = vset.pattern.permute.xlu0 0
  %44 = vperm.xlu0 %43, %v24
  %v45 = vpop.permute.xlu0 %44
  %48 = vset.pattern.permute.xlu0 0
  %49 = vperm.xlu0 %48, %v25
  %v50 = vpop.permute.xlu0 %49
  %53 = vset.pattern.permute.xlu0 0
  %54 = vperm.xlu0 %53, %v26
  %v55 = vpop.permute.xlu0 %54
  %58 = vset.pattern.permute.xlu0 0
  %59 = vperm.xlu0 %58, %v27
  %v60 = vpop.permute.xlu0 %59
  %63 = vset.pattern.permute.xlu0 0
  %64 = vperm.xlu0 %63, %v28
  %v65 = vpop.permute.xlu0 %64
  %68 = vset.pattern.permute.xlu0 0
  %69 = vperm.xlu0 %68, %v29
  %v70 = vpop.permute.xlu0 %69
  %v72 = vlaneseq
  %v73 = vshrl.u32 %v72, 7
  %v74 = vsub.s32 0, %v73
  %v75 = vrot.slane %v22, %v74
  %v76 = vmul.f32 %v40, %v75
  %v77 = vmul.f32 %v45, %v75
  %v78 = vmul.f32 %v50, %v75
  %v79 = vmul.f32 %v55, %v75
  %v80 = vmul.f32 %v60, %v75
  %v81 = vmul.f32 %v65, %v75
  %v82 = vmul.f32 %v70, %v75
  %84 = vset.pattern.permute.xlu0 0
  %85 = vperm.xlu0 %84, %v30
  %v86 = vpop.permute.xlu0 %85
  %89 = vset.pattern.permute.xlu0 0
  %90 = vperm.xlu0 %89, %v31
  %v91 = vpop.permute.xlu0 %90
  %94 = vset.pattern.permute.xlu0 0
  %95 = vperm.xlu0 %94, %v32
  %v96 = vpop.permute.xlu0 %95
  %99 = vset.pattern.permute.xlu0 0
  %100 = vperm.xlu0 %99, %v33
  %v101 = vpop.permute.xlu0 %100
  %104 = vset.pattern.permute.xlu0 0
  %105 = vperm.xlu0 %104, %v34
  %v106 = vpop.permute.xlu0 %105
  %109 = vset.pattern.permute.xlu0 0
  %110 = vperm.xlu0 %109, %v35
  %v111 = vpop.permute.xlu0 %110
  %114 = vset.pattern.permute.xlu0 0
  %115 = vperm.xlu0 %114, %v36
  %v116 = vpop.permute.xlu0 %115
  %v118 = vadd.f32 %v86, %v76
  %v119 = vadd.f32 %v91, %v77
  %v120 = vadd.f32 %v96, %v78
  %v121 = vadd.f32 %v101, %v79
  %v122 = vadd.f32 %v106, %v80
  %v123 = vadd.f32 %v111, %v81
  %v124 = vadd.f32 %v116, %v82
  %125 = vset.pattern.permute.xlu0 1
  %126 = vperm.xlu0 %125, %v23
  %v127 = vpop.permute.xlu0 %126
  %129 = vset.pattern.permute.xlu0 1
  %130 = vperm.xlu0 %129, %v24
  %v131 = vpop.permute.xlu0 %130
  %133 = vset.pattern.permute.xlu0 1
  %134 = vperm.xlu0 %133, %v25
  %v135 = vpop.permute.xlu0 %134
  %137 = vset.pattern.permute.xlu0 1
  %138 = vperm.xlu0 %137, %v26
  %v139 = vpop.permute.xlu0 %138
  %141 = vset.pattern.permute.xlu0 1
  %142 = vperm.xlu0 %141, %v27
  %v143 = vpop.permute.xlu0 %142
  %145 = vset.pattern.permute.xlu0 1
  %146 = vperm.xlu0 %145, %v28
  %v147 = vpop.permute.xlu0 %146
  %149 = vset.pattern.permute.xlu0 1
  %150 = vperm.xlu0 %149, %v29
  %v151 = vpop.permute.xlu0 %150
  %v153 = vlaneseq
  %v154 = vshrl.u32 %v153, 7
  %v155 = vsub.s32 1, %v154
  %v156 = vrot.slane %v22, %v155
  %v157 = vmul.f32 %v127, %v156
  %v158 = vmul.f32 %v131, %v156
  %v159 = vmul.f32 %v135, %v156
  %v160 = vmul.f32 %v139, %v156
  %v161 = vmul.f32 %v143, %v156
  %v162 = vmul.f32 %v147, %v156
  %v163 = vmul.f32 %v151, %v156
  %v164 = vadd.f32 %v118, %v157
  %v165 = vadd.f32 %v119, %v158
  %v166 = vadd.f32 %v120, %v159
  %v167 = vadd.f32 %v121, %v160
  %v168 = vadd.f32 %v122, %v161
  %v169 = vadd.f32 %v123, %v162
  %v170 = vadd.f32 %v124, %v163
  %171 = vset.pattern.permute.xlu0 2
  %172 = vperm.xlu0 %171, %v23
  %v173 = vpop.permute.xlu0 %172
  %175 = vset.pattern.permute.xlu0 2
  %176 = vperm.xlu0 %175, %v24
  %v177 = vpop.permute.xlu0 %176
  %179 = vset.pattern.permute.xlu0 2
  %180 = vperm.xlu0 %179, %v25
  %v181 = vpop.permute.xlu0 %180
  %183 = vset.pattern.permute.xlu0 2
  %184 = vperm.xlu0 %183, %v26
  %v185 = vpop.permute.xlu0 %184
  %187 = vset.pattern.permute.xlu0 2
  %188 = vperm.xlu0 %187, %v27
  %v189 = vpop.permute.xlu0 %188
  %191 = vset.pattern.permute.xlu0 2
  %192 = vperm.xlu0 %191, %v28
  %v193 = vpop.permute.xlu0 %192
  %195 = vset.pattern.permute.xlu0 2
  %196 = vperm.xlu0 %195, %v29
  %v197 = vpop.permute.xlu0 %196
  %v199 = vlaneseq
  %v200 = vshrl.u32 %v199, 7
  %v201 = vsub.s32 2, %v200
  %v202 = vrot.slane %v22, %v201
  %v203 = vmul.f32 %v173, %v202
  %v204 = vmul.f32 %v177, %v202
  %v205 = vmul.f32 %v181, %v202
  %v206 = vmul.f32 %v185, %v202
  %v207 = vmul.f32 %v189, %v202
  %v208 = vmul.f32 %v193, %v202
  %v209 = vmul.f32 %v197, %v202
  %v210 = vadd.f32 %v164, %v203
  %v211 = vadd.f32 %v165, %v204
  %v212 = vadd.f32 %v166, %v205
  %v213 = vadd.f32 %v167, %v206
  %v214 = vadd.f32 %v168, %v207
  %v215 = vadd.f32 %v169, %v208
  %v216 = vadd.f32 %v170, %v209
  %v217 = vmax.f32 %v210, 0.0
  %v218 = vmax.f32 %v211, 0.0
  %v219 = vmax.f32 %v212, 0.0
  %v220 = vmax.f32 %v213, 0.0
  %v221 = vmax.f32 %v214, 0.0
  %v222 = vmax.f32 %v215, 0.0
  %v223 = vmax.f32 %v216, 0.0
  %v224 = vld [vmem:[%s3] sm:$0xff]
  %v225 = vld [vmem:[%s3 + $0x8] sm:$0xff]
  %v226 = vld [vmem:[%s3 + $0x10] sm:$0xff]
  %v227 = vld [vmem:[%s3 + $0x18] sm:$0xff]
  %v228 = vld [vmem:[%s3 + $0x20] sm:$0xff]
  %v229 = vld [vmem:[%s3 + $0x28] sm:$0xff]
  %v230 = vld [vmem:[%s3 + $0x30] sm:$0x3]
  %232 = vset.pattern.permute.xlu0 0
  %233 = vperm.xlu0 %232, %v224
  %v234 = vpop.permute.xlu0 %233
  %237 = vset.pattern.permute.xlu0 0
  %238 = vperm.xlu0 %237, %v225
  %v239 = vpop.permute.xlu0 %238
  %242 = vset.pattern.permute.xlu0 0
  %243 = vperm.xlu0 %242, %v226
  %v244 = vpop.permute.xlu0 %243
  %247 = vset.pattern.permute.xlu0 0
  %248 = vperm.xlu0 %247, %v227
  %v249 = vpop.permute.xlu0 %248
  %252 = vset.pattern.permute.xlu0 0
  %253 = vperm.xlu0 %252, %v228
  %v254 = vpop.permute.xlu0 %253
  %257 = vset.pattern.permute.xlu0 0
  %258 = vperm.xlu0 %257, %v229
  %v259 = vpop.permute.xlu0 %258
  %262 = vset.pattern.permute.xlu0 0
  %263 = vperm.xlu0 %262, %v230
  %v264 = vpop.permute.xlu0 %263
  %v266 = vmul.f32 %v234, %v217
  %v267 = vmul.f32 %v239, %v218
  %v268 = vmul.f32 %v244, %v219
  %v269 = vmul.f32 %v249, %v220
  %v270 = vmul.f32 %v254, %v221
  %v271 = vmul.f32 %v259, %v222
  %v272 = vmul.f32 %v264, %v223
  %v273 = vadd.f32 %v266, %v267
  %v274 = vadd.f32 %v273, %v268
  %v275 = vadd.f32 %v274, %v269
  %v276 = vadd.f32 %v275, %v270
  %v277 = vadd.f32 %v276, %v271
  %vm278 = vcmask 1041408
  %v279 = vsel %vm278, %v272, 0.0
  %v280 = vadd.f32 %v277, %v279
  %v281 = vrot.slane %v280, 4
  %v282 = vadd.f32 %v280, %v281
  %v283 = vrot.slane %v282, 2
  %v284 = vadd.f32 %v282, %v283
  %v285 = vrot.slane %v284, 1
  %v286 = vadd.f32 %v284, %v285
  %v287 = vld [vmem:[#allocation2] sm:$0x1]
  %289 = vset.pattern.permute.xlu0 0
  %290 = vperm.xlu0 %289, %v287
  %v291 = vpop.permute.xlu0 %290
  %v293 = vlaneseq
  %v294 = vshrl.u32 %v293, 7
  %v295 = vsub.s32 0, %v294
  %v296 = vrot.slane %v291, %v295
  %v297 = vadd.f32 %v286, %v296
  %298 = vst [vmem:[%s5] sm:$0x1] %v297
  // Predicated region
  $region22: #{simple_nn_forward.1} parent=0 // pred_check
    _
  $region23: #{simple_nn_forward.1} parent=0 // pred_check_branch
    %300 = sbr.rel (0) target = $region25
  $region24: #{simple_nn_forward.1} parent=0 // pred_region
    _
  $region25: #{simple_nn_forward.1} parent=0 // pred_fallthru
    _
  // Predicated region
  $region26: #{simple_nn_forward.1} parent=0 // pred_check
    _
  $region27: #{simple_nn_forward.1} parent=0 // pred_check_branch
    %302 = sbr.rel (0) target = $region29
  $region28: #{simple_nn_forward.1} parent=0 // pred_region
    _
  $region29: #{simple_nn_forward.1} parent=0 // pred_fallthru
    _

</llo_original>
